<compile_context>
chip_gen: v5e
topology: v5e:2x2
jax: 0.10.0
libtpu: 0.0.40
codegen_flags: <defaults>
</compile_context>

<pallas_src>
import functools

import jax
import jax.numpy as jnp
from jax.experimental import pallas as pl
from jax.experimental.pallas import tpu as pltpu


_LANE = 128
_TARGET_TILE_BYTES = 8 << 20       # ~8 MiB tiles: overhead amortized, fits all gens
_MIN_MULTISTEP_BYTES = 4 << 20     # above this, force >=2 grid steps (v7x dual-TC)
_MAX_ROWS = 4096                   # bounds the lane-padded (rows,1) column footprint


def _round_up(x, m):
    return -(-x // m) * m


# ---------------------------------------------------------------------------
# Kernels
# ---------------------------------------------------------------------------

def _norm_kernel_resident(scale_ref, shift_ref, img_ref, out_ref, *, rows):
    # scale/shift are the full (M_pad, 1) f32 columns, resident in VMEM (their
    # block index is constant, so they are DMA'd only once). Slice the rows for
    # this step; compute in f32 and cast on store.
    r0 = pl.multiple_of(pl.program_id(0) * rows, rows)
    sc = scale_ref[pl.ds(r0, rows), :]
    sh = shift_ref[pl.ds(r0, rows), :]
    x = img_ref[...].astype(jnp.float32)
    out_ref[...] = (x * sc + sh).astype(out_ref.dtype)


def _norm_kernel_blocked(scale_ref, shift_ref, img_ref, out_ref):
    # Fallback for very large M: per-block (rows, 1) scale/shift tiles.
    x = img_ref[...].astype(jnp.float32)
    out_ref[...] = (x * scale_ref[...] + shift_ref[...]).astype(out_ref.dtype)


# ---------------------------------------------------------------------------
# Tiling choice
# ---------------------------------------------------------------------------

def _choose_tiling(M, L, itemsize, target_bytes=_TARGET_TILE_BYTES):
    """Pick (rows, l_block) for the (M, L) view, respecting the (8,128) rule."""
    sublane = 8 * max(1, 4 // itemsize)        # packed sublane: 8 f32, 16 bf16, 32 i8

    # --- lane (L) axis: tile it only when a sublane-height slab already busts
    #     the target.  l_block must be a multiple of 128 (or the full L). ------
    if L < _LANE or L * itemsize * sublane <= target_bytes:
        l_block = L
    else:
        l_block = (target_bytes // (sublane * itemsize)) // _LANE * _LANE
        l_block = max(_LANE, min(l_block, (L // _LANE) * _LANE))

    # --- sublane (rows) axis ---------------------------------------------------
    block_row_bytes = max(1, l_block * itemsize)
    rows = max(1, target_bytes // block_row_bytes)
    rows = max(sublane, (rows // sublane) * sublane)
    rows = min(rows, _MAX_ROWS)
    if rows >= M:
        rows = M                               # full-dim blocks are always legal
    else:
        # Prefer a rows value that divides M evenly (no ragged, masked tail).
        r = rows
        while r >= max(sublane, rows // 2):
            if M % r == 0:
                rows = r
                break
            r -= sublane

    # --- guarantee >=2 grid steps on non-trivial inputs so both v7x TensorCores
    #     get work (dimension_semantics="parallel" only helps with >1 step). ----
    total_bytes = M * L * itemsize
    if total_bytes > _MIN_MULTISTEP_BYTES and \
            pl.cdiv(M, rows) * pl.cdiv(L, l_block) < 2:
        if M >= 2 * sublane:
            rows = min(M, _round_up(-(-M // 2), sublane))
        elif L >= 2 * _LANE:
            l_block = min(L, _round_up(-(-L // 2), _LANE))

    return rows, l_block


# ---------------------------------------------------------------------------
# Wrapper
# ---------------------------------------------------------------------------

def normalization_forward(img, mean, std):
    """(img - mean[None,:,None,None]) / std[None,:,None,None] for NCHW img."""
    N, C, H, W = img.shape
    mean = jnp.asarray(mean).reshape(-1)
    std = jnp.asarray(std).reshape(-1)
    assert mean.shape == (C,) and std.shape == (C,)

    dtype = img.dtype
    itemsize = jnp.dtype(dtype).itemsize
    M, L = N * C, H * W

    rows, l_block = _choose_tiling(M, L, itemsize)
    gr, gl = pl.cdiv(M, rows), pl.cdiv(L, l_block)
    M_pad = gr * rows

    # Fused constants kept in float32 (exact reciprocal, no low-precision
    # rounding of 1/std or -mean/std even for bf16/int8 images).
    scale = 1.0 / std.astype(jnp.float32)                       # (C,)
    shift = -mean.astype(jnp.float32) * scale                   # (C,)
    scale_col = jnp.pad(jnp.tile(scale, N), (0, M_pad - M),
                        constant_values=1.0).reshape(M_pad, 1)
    shift_col = jnp.pad(jnp.tile(shift, N), (0, M_pad - M),
                        constant_values=0.0).reshape(M_pad, 1)

    x2d = img.reshape(M, L)

    # (rows, 1) columns are lane-padded to 128 lanes in VMEM (~512 B per row).
    col_row_vmem = _LANE * 4
    resident = 2 * M_pad * col_row_vmem <= (4 << 20)

    if resident:
        kernel = functools.partial(_norm_kernel_resident, rows=rows)
        col_specs = [
            pl.BlockSpec((M_pad, 1), lambda i, j: (0, 0)),   # fetched once
            pl.BlockSpec((M_pad, 1), lambda i, j: (0, 0)),
        ]
        col_vmem_bytes = 2 * 2 * M_pad * col_row_vmem
    else:
        kernel = _norm_kernel_blocked
        col_specs = [
            pl.BlockSpec((rows, 1), lambda i, j: (i, 0)),
            pl.BlockSpec((rows, 1), lambda i, j: (i, 0)),
        ]
        col_vmem_bytes = 2 * 2 * rows * col_row_vmem

    # Explicit scoped-VMEM budget: img in + out, double-buffered, plus the
    # scale/shift columns and slack.  Capped at 48 MiB (safe inside v7x's
    # 64 MiB physical VMEM; well under v5e/v6e's 128 MiB).
    tile_bytes = rows * l_block * itemsize
    vmem_limit = 4 * tile_bytes + col_vmem_bytes + (2 << 20)
    vmem_limit = int(max(16 << 20, min(vmem_limit, 48 << 20)))

    out2d = pl.pallas_call(
        kernel,
        out_shape=jax.ShapeDtypeStruct((M, L), dtype),
        grid=(gr, gl),
        in_specs=col_specs + [
            pl.BlockSpec((rows, l_block), lambda i, j: (i, j)),   # img tile
        ],
        out_specs=pl.BlockSpec((rows, l_block), lambda i, j: (i, j)),
        compiler_params=pltpu.CompilerParams(
            dimension_semantics=("parallel", "parallel"),   # v7x dual-TC sharding
            vmem_limit_bytes=vmem_limit,
        ),
    )(scale_col, shift_col, x2d)

    # Note: output keeps img.dtype (PyTorch would promote a low-precision img to
    # f32 when the buffers are f32; for f32 images the semantics are identical).
    return out2d.reshape(N, C, H, W)


if __name__ == "__main__":
    # Deterministic setup (synthetic buffers, analogous to
    # register_buffer('mean'/'std', tensor.view(-1, 1, 1))).
    key = jax.random.PRNGKey(0)
    k_img, _ = jax.random.split(key)

    N, C, H, W = 2, 4, 16, 16
    img = jax.random.normal(k_img, (N, C, H, W), dtype=jnp.float32)

    mean = jnp.array([0.485, 0.456, 0.406, 0.5], dtype=jnp.float32)
    std = jnp.array([0.229, 0.224, 0.225, 0.25], dtype=jnp.float32)

    out = jax.block_until_ready(normalization_forward(img, mean, std))

    # Reference (pure JAX, mirrors the PyTorch broadcasting semantics).
    ref = (img - mean[None, :, None, None]) / std[None, :, None, None]
    assert out.shape == img.shape and out.dtype == img.dtype
    # Fused scale/shift vs subtract-then-divide differ by a couple of ulps.
    assert jnp.allclose(out, ref, atol=1e-5, rtol=1e-5)

    print("KERNEL_OK")
</pallas_src>

<mosaic_0001>
module attributes {stable_mosaic.version = 11 : i64} {
  func.func @_norm_kernel_resident(%arg0: i32, %arg1: i32, %arg2: memref<8x1xf32, #tpu.memory_space<vmem>>, %arg3: memref<8x1xf32, #tpu.memory_space<vmem>>, %arg4: memref<8x256xf32, #tpu.memory_space<vmem>>, %arg5: memref<8x256xf32, #tpu.memory_space<vmem>>) attributes {dimension_semantics = [#tpu.dimension_semantics<parallel>, #tpu.dimension_semantics<parallel>], iteration_bounds = array<i64: 1, 1>, scalar_prefetch = 0 : i64, scratch_operands = 0 : i64, tpu.core_type = #tpu.core_type<tc>, window_params = [{pipeline_mode = #tpu.pipeline_mode<synchronous>, transform_indices = @transform_0, window_bounds = array<i64: 8, 1>}, {pipeline_mode = #tpu.pipeline_mode<synchronous>, transform_indices = @transform_1, window_bounds = array<i64: 8, 1>}, {transform_indices = @transform_2, window_bounds = array<i64: 8, 256>}, {transform_indices = @transform_3, window_bounds = array<i64: 8, 256>}]} {
    %c8_i32 = arith.constant 8 : i32
    %0 = arith.muli %arg0, %c8_i32 : i32
    %1 = tpu.assume_multiple %0, 8 : i32
    %2 = arith.index_cast %1 : i32 to index
    %c0 = arith.constant 0 : index
    %3 = vector.load %arg2[%2, %c0] : memref<8x1xf32, #tpu.memory_space<vmem>>, vector<8x1xf32>
    %4 = arith.index_cast %1 : i32 to index
    %c0_0 = arith.constant 0 : index
    %5 = vector.load %arg3[%4, %c0_0] : memref<8x1xf32, #tpu.memory_space<vmem>>, vector<8x1xf32>
    %c0_1 = arith.constant 0 : index
    %c0_2 = arith.constant 0 : index
    %6 = vector.load %arg4[%c0_1, %c0_2] : memref<8x256xf32, #tpu.memory_space<vmem>>, vector<8x256xf32>
    %7 = vector.broadcast %3 : vector<8x1xf32> to vector<8x256xf32>
    %8 = arith.mulf %6, %7 : vector<8x256xf32>
    %9 = vector.broadcast %5 : vector<8x1xf32> to vector<8x256xf32>
    %10 = arith.addf %8, %9 : vector<8x256xf32>
    %c0_3 = arith.constant 0 : index
    %c0_4 = arith.constant 0 : index
    %11 = vector.load %arg5[%c0_3, %c0_4] : memref<8x256xf32, #tpu.memory_space<vmem>>, vector<8x256xf32>
    tpu.vector_store %arg5[%c0_3, %c0_4], %10 {strides = array<i32>} : memref<8x256xf32, #tpu.memory_space<vmem>>, vector<8x256xf32>,
    return
  }
  func.func @transform_0(%arg0: i32, %arg1: i32) -> (i32, i32) {
    %c0_i32 = arith.constant 0 : i32
    %c0_i32_0 = arith.constant 0 : i32
    %c0_i32_1 = arith.constant 0 : i32
    return %c0_i32, %c0_i32_0 : i32, i32
  }
  func.func @transform_1(%arg0: i32, %arg1: i32) -> (i32, i32) {
    %c0_i32 = arith.constant 0 : i32
    %c0_i32_0 = arith.constant 0 : i32
    %c0_i32_1 = arith.constant 0 : i32
    return %c0_i32, %c0_i32_0 : i32, i32
  }
  func.func @transform_2(%arg0: i32, %arg1: i32) -> (i32, i32) {
    %c0_i32 = arith.constant 0 : i32
    return %arg0, %arg1 : i32, i32
  }
  func.func @transform_3(%arg0: i32, %arg1: i32) -> (i32, i32) {
    %c0_i32 = arith.constant 0 : i32
    return %arg0, %arg1 : i32, i32
  }
}

</mosaic_0001>

<llo_original>
// kernel: tpu_custom_call.1
$region0: #{tpu_custom_call.1}
  #allocation0 [shape = 'u32[]', space=smem, size = 0x4, offset = 0x4, fixed_abs, tag = 'smem constant byte address 0x4 - core index']
  #allocation1 [shape = 'u32[72,128]{1,0:T(1,128)}', space=vmem, size = 0x9000, scoped, tag = 'internal scratch']
  %s0 = inlined_call_operand.vmem [shape: f32[8,1], index: 0, kind: input, shape index: {}]
  %s1 = inlined_call_operand.vmem [shape: f32[8,1], index: 1, kind: input, shape index: {}]
  %s2 = inlined_call_operand.vmem [shape: f32[8,256], index: 2, kind: input, shape index: {}]
  %s3 = inlined_call_operand.hbm [shape: f32[8,256], index: 3, kind: output, shape index: {}]
  %s4 = sld [smem:[#allocation0]]
  $region22: #{tpu_custom_call.1} parent=0
    _
  %s6 = ssub.s32 1, %s4
  %s7 = scalar_select 0, %s6, %s4
  $region1: #{tpu_custom_call.1} parent=0
    #allocation2 [shape = 'u8[8192]{0}', space=vmem, size = 0x2000, scoped, tag = 'output window, operand 0, single buffered']
    #allocation3 [shape = 's32[1]{0}', space=sflag, size = 0x4, scoped, tag = 'scoped memory for tpu_custom_call.1']
    %8 = vsyncpa [#allocation3], 0
    // Predicated region
    $region2: #{tpu_custom_call.1} parent=1 // pred_check
      _
    $region3: #{tpu_custom_call.1} parent=1 // pred_check_branch
      %10 = sbr.rel (0) target = $region5
    $region4: #{tpu_custom_call.1} parent=1 // pred_region
      _
    $region5: #{tpu_custom_call.1} parent=1 // pred_fallthru
      _
    // Predicated region
    $region6: #{tpu_custom_call.1} parent=1 // pred_check
      _
    $region7: #{tpu_custom_call.1} parent=1 // pred_check_branch
      %12 = sbr.rel (0) target = $region9
    $region8: #{tpu_custom_call.1} parent=1 // pred_region
      _
    $region9: #{tpu_custom_call.1} parent=1 // pred_fallthru
      _
    // Predicated region
    $region10: #{tpu_custom_call.1} parent=1 // pred_check
      _
    $region11: #{tpu_custom_call.1} parent=1 // pred_check_branch
      %14 = sbr.rel (0) target = $region13
    $region12: #{tpu_custom_call.1} parent=1 // pred_region
      _
    $region13: #{tpu_custom_call.1} parent=1 // pred_fallthru
      _
    %s15 = smul.u32 0, 8
    %s16 = scalar_lea.vmem %s0, %s15
    %v17 = vld [vmem:[%s16] sm:$0xff]
    %s18 = scalar_lea.vmem %s1, %s15
    %v19 = vld [vmem:[%s18] sm:$0xff]
    %v20 = vld [vmem:[%s2] sm:$0xff]
    %v21 = vld [vmem:[%s2 + $0x8] sm:$0xff]
    %23 = vset.pattern.permute.xlu0 0
    %24 = vperm.xlu0 %23, %v17
    %v25 = vpop.permute.xlu0 %24
    %v27 = vmul.f32 %v20, %v25
    %v28 = vmul.f32 %v21, %v25
    %30 = vset.pattern.permute.xlu0 0
    %31 = vperm.xlu0 %30, %v19
    %v32 = vpop.permute.xlu0 %31
    %v34 = vadd.f32 %v27, %v32
    %v35 = vadd.f32 %v28, %v32
    %36 = vst [vmem:[#allocation2] sm:$0xff] %v34
    %37 = vst [vmem:[#allocation2 + $0x8] sm:$0xff] %v35
    // Predicated region
    $region14: #{tpu_custom_call.1} parent=1 // pred_check
      _
    $region15: #{tpu_custom_call.1} parent=1 // pred_check_branch
      %39 = sbr.rel (0) target = $region17
    $region16: #{tpu_custom_call.1} parent=1 // pred_region
      %41 = vsyncadd [#allocation3], 0
      %s43 = sshll.u32 [#allocation2], 4
      %s44 = int_to_ptr.vmem [resolvable:$true] %s43
      %s45 = sshll.u32 %s3, 4
      %s46 = int_to_ptr.hbm [resolvable:$true] %s45
      %48 = dma.vmem_to_hbm [thread:$0]  %s44, 256, %s46, [#allocation3]
    $region17: #{tpu_custom_call.1} parent=1 // pred_fallthru
      _
    // Predicated region
    $region18: #{tpu_custom_call.1} parent=1 // pred_check
      _
    $region19: #{tpu_custom_call.1} parent=1 // pred_check_branch
      %50 = sbr.rel (0) target = $region21
    $region20: #{tpu_custom_call.1} parent=1 // pred_region
      %52 = dma.done [#allocation3], 256
    $region21: #{tpu_custom_call.1} parent=1 // pred_fallthru
      _
    %53 = vsyncpa [#allocation3], 1

</llo_original>
